<compile_context>
chip_gen: v6e
topology: v6e:2x2x1
jax: 0.10.0
libtpu: 0.0.40
codegen_flags: <defaults>
</compile_context>

<pallas_src>
import functools

import jax
import jax.numpy as jnp
from jax import lax
from jax.experimental import pallas as pl
from jax.experimental.pallas import tpu as pltpu


def _round_up(x, m):
    return ((x + m - 1) // m) * m


def _sublane(dtype):
    # rows per vreg sublane group: 8 for f32, 16 for bf16, 32 for int8/fp8
    bits = jnp.dtype(dtype).itemsize * 8
    return max(8, 256 // bits)


def _vmem_limit(estimate_bytes):
    # per-shape scoped VMEM request (review: don't hardcode 48 MiB)
    return int(min(max(estimate_bytes, 32 << 20), 100 << 20))


# ---------------------------------------------------------------------------
# Tiled matmul (output projection): grid=(M/tm, N/tn, K/tk), f32 accumulator,
# K innermost ("arbitrary"), M/N "parallel".  Inputs are zero-padded up to the
# tile so tm/tn/tk never collapse to tiny tiles (weight re-streaming fix).
# ---------------------------------------------------------------------------
def _matmul_kernel(x_ref, w_ref, o_ref, acc_ref):
    @pl.when(pl.program_id(2) == 0)
    def _():
        acc_ref[...] = jnp.zeros_like(acc_ref)

    acc_ref[...] += jnp.dot(x_ref[...], w_ref[...],
                            preferred_element_type=jnp.float32)

    @pl.when(pl.program_id(2) == pl.num_programs(2) - 1)
    def _():
        o_ref[...] = acc_ref[...].astype(o_ref.dtype)


def _matmul_bias_kernel(x_ref, w_ref, b_ref, o_ref, acc_ref):
    @pl.when(pl.program_id(2) == 0)
    def _():
        acc_ref[...] = jnp.zeros_like(acc_ref)

    acc_ref[...] += jnp.dot(x_ref[...], w_ref[...],
                            preferred_element_type=jnp.float32)

    @pl.when(pl.program_id(2) == pl.num_programs(2) - 1)
    def _():
        o_ref[...] = (acc_ref[...] + b_ref[...].astype(jnp.float32)).astype(o_ref.dtype)


def matmul(x, w, b=None, *, tm=256, tn=256, tk=512):
    """x: (M, K), w: (K, N), optional b: (N,)/(1, N) -> (M, N)."""
    M, K = x.shape
    K2, N = w.shape
    assert K == K2
    itemsize = jnp.dtype(x.dtype).itemsize

    # Full-dim blocks when small, otherwise big aligned tiles with zero padding
    # (keeps weight traffic at M/tm re-reads with tm=256, not tm=64).
    # On v6e/v5e (128 MiB VMEM) tm=tn=512 is also a good choice; 256 fits v7x.
    if M <= tm:
        tm, Mp = M, M
    else:
        tm = _round_up(tm, _sublane(x.dtype))
        Mp = _round_up(M, tm)
    if N <= tn:
        tn, Np = N, N
    else:
        Np = _round_up(N, tn)
    if K <= tk:
        tk, Kp = K, K
    else:
        Kp = _round_up(K, tk)

    xp = x if (Mp == M and Kp == K) else jnp.pad(x, ((0, Mp - M), (0, Kp - K)))
    wp = w if (Kp == K and Np == N) else jnp.pad(w, ((0, Kp - K), (0, Np - N)))

    grid = (Mp // tm, Np // tn, Kp // tk)
    in_specs = [
        pl.BlockSpec((tm, tk), lambda i, j, k: (i, k)),
        pl.BlockSpec((tk, tn), lambda i, j, k: (k, j)),
    ]
    if b is None:
        kernel = _matmul_kernel
        args = (xp, wp)
    else:
        b2 = b.reshape(1, -1)
        bp = b2 if Np == N else jnp.pad(b2, ((0, 0), (0, Np - N)))
        kernel = _matmul_bias_kernel
        in_specs.append(pl.BlockSpec((1, tn), lambda i, j, k: (0, j)))
        args = (xp, wp, bp)

    est = (2 * (tm * tk + tk * tn + tm * tn) * itemsize  # double-buffered blocks
           + tm * tn * 4                                 # f32 accumulator
           + 2 * tn * itemsize                           # bias block
           + (4 << 20))                                  # headroom

    out = pl.pallas_call(
        kernel,
        out_shape=jax.ShapeDtypeStruct((Mp, Np), x.dtype),
        grid_spec=pltpu.PrefetchScalarGridSpec(
            num_scalar_prefetch=0,
            grid=grid,
            in_specs=in_specs,
            out_specs=pl.BlockSpec((tm, tn), lambda i, j, k: (i, j)),
            scratch_shapes=[pltpu.VMEM((tm, tn), jnp.float32)],
        ),
        compiler_params=pltpu.CompilerParams(
            dimension_semantics=("parallel", "parallel", "arbitrary"),
            vmem_limit_bytes=_vmem_limit(est),
        ),
    )(*args)

    if Mp != M or Np != N:
        out = out[:M, :N]
    return out


# ---------------------------------------------------------------------------
# Fused QKV-projection + attention core.
#   grid = (B, H), both "parallel".
#   in : x (1, N, C) block (re-used across the inner H steps -> fetched once
#        per batch element), Wqkv resident as a (3H, C, D) VMEM slab (constant
#        index_map -> DMA'd once for the whole kernel).
#   out: o    (1, 1, N, D) block of (B, H, N, D)
#        attn (1, 1, N, N) block of (B, H, N, N)   [optional]
# ---------------------------------------------------------------------------
def _fused_attn_kernel(x_ref, w_ref, o_ref, *opt_attn_ref, num_heads):
    h = pl.program_id(1)
    x = x_ref[0]                               # (N, C), model dtype

    # per-head weight slices via dynamic first-axis ref indexing (no lane slicing)
    wq = w_ref[h]                              # (C, D); softmax scale pre-folded
    wk = w_ref[num_heads + h]                  # (C, D)
    wv = w_ref[2 * num_heads + h]              # (C, D)

    feed = x_ref.dtype                         # keep MXU feeds in the model dtype

    q = jnp.dot(x, wq, preferred_element_type=jnp.float32).astype(feed)   # (N, D)
    k = jnp.dot(x, wk, preferred_element_type=jnp.float32).astype(feed)   # (N, D)
    v = jnp.dot(x, wv, preferred_element_type=jnp.float32).astype(feed)   # (N, D)

    # scores: contract the shared head_dim axis directly (no K transpose)
    s = lax.dot_general(q, k, (((1,), (1,)), ((), ())),
                        preferred_element_type=jnp.float32)               # (N, N)

    # numerically-stable softmax in f32; exact normalisation so returned
    # attention rows sum to 1 (matches the PyTorch reference exactly).
    s = s - jnp.max(s, axis=-1, keepdims=True)
    p = jnp.exp(s)
    attn = p * (1.0 / jnp.sum(p, axis=-1, keepdims=True))

    if opt_attn_ref:
        opt_attn_ref[0][0, 0] = attn.astype(opt_attn_ref[0].dtype)

    o = jnp.dot(attn.astype(feed), v, preferred_element_type=jnp.float32)  # (N, D)
    o_ref[0, 0] = o.astype(o_ref.dtype)


def mha_fused(x, w_qkv_heads, *, return_attn=True):
    """x: (B, N, C), w_qkv_heads: (3H, C, D) -> (o (B,H,N,D), attn (B,H,N,N)|None)."""
    B, N, C = x.shape
    three_h, C2, D = w_qkv_heads.shape
    assert C2 == C and three_h % 3 == 0
    H = three_h // 3
    itemsize = jnp.dtype(x.dtype).itemsize

    kern = functools.partial(_fused_attn_kernel, num_heads=H)

    if return_attn:
        out_shape = (jax.ShapeDtypeStruct((B, H, N, D), x.dtype),
                     jax.ShapeDtypeStruct((B, H, N, N), x.dtype))
        out_specs = (pl.BlockSpec((1, 1, N, D), lambda b, h: (b, h, 0, 0)),
                     pl.BlockSpec((1, 1, N, N), lambda b, h: (b, h, 0, 0)))
    else:
        # Skipping the (B, H, N, N) HBM write makes the core MXU-bound.
        out_shape = jax.ShapeDtypeStruct((B, H, N, D), x.dtype)
        out_specs = pl.BlockSpec((1, 1, N, D), lambda b, h: (b, h, 0, 0))

    est = (2 * N * C * itemsize              # x block (double-buffered)
           + 2 * 3 * C * C * itemsize        # resident Wqkv slab
           + 2 * N * D * itemsize            # o block
           + (2 * N * N * itemsize if return_attn else 0)
           + 4 * N * N * 4 + 4 * N * D * 4   # in-kernel f32 temporaries
           + (4 << 20))

    outs = pl.pallas_call(
        kern,
        out_shape=out_shape,
        grid_spec=pltpu.PrefetchScalarGridSpec(
            num_scalar_prefetch=0,
            grid=(B, H),
            in_specs=[
                pl.BlockSpec((1, N, C), lambda b, h: (b, 0, 0)),
                pl.BlockSpec((3 * H, C, D), lambda b, h: (0, 0, 0)),
            ],
            out_specs=out_specs,
        ),
        compiler_params=pltpu.CompilerParams(
            dimension_semantics=("parallel", "parallel"),
            vmem_limit_bytes=_vmem_limit(est),
        ),
    )(x, w_qkv_heads)

    if return_attn:
        o, attn = outs
        return o, attn
    return outs, None


# ---------------------------------------------------------------------------
# Parameter prep (one-time): head-major Wqkv layout + folded softmax scale.
# ---------------------------------------------------------------------------
def prepare_params(w_qkv, w_proj, b_proj, *, num_heads):
    """torch layouts -> kernel-ready layouts.

    w_qkv:  (3C, C)  torch Linear weight (qkv = x @ w_qkv.T)
    w_proj: (C, C)   torch Linear weight
    b_proj: (C,)
    returns (w_qkv_heads (3H, C, D) with scale folded into Q,
             w_proj_t (C, C), b_proj (1, C))
    """
    three_c, C = w_qkv.shape
    assert three_c == 3 * C and C % num_heads == 0
    D = C // num_heads
    scale = float(D) ** -0.5
    w = w_qkv.reshape(3, num_heads, D, C)          # the 3C axis factors as (3, H, D)
    w = w.at[0].multiply(scale)                    # fold softmax scale into Q weights
    w = jnp.transpose(w, (0, 1, 3, 2))             # (3, H, C, D)
    w_qkv_heads = w.reshape(3 * num_heads, C, D)
    return w_qkv_heads, w_proj.T, b_proj.reshape(1, -1)


def attention_forward(x, w_qkv_heads, w_proj_t, b_proj, *, return_attn=True):
    B, N, C = x.shape
    o, attn = mha_fused(x, w_qkv_heads, return_attn=return_attn)   # (B,H,N,D)
    # one pass over B*N*C elements to get the lane-dense (B*N, C) proj input
    o_bnc = jnp.transpose(o, (0, 2, 1, 3)).reshape(B * N, C)
    y = matmul(o_bnc, w_proj_t, b_proj).reshape(B, N, C)
    return y, attn


# ---------------------------------------------------------------------------
# Plain-JAX reference (original torch weight layout) for a sanity check
# ---------------------------------------------------------------------------
def attention_reference(x, w_qkv, w_proj, b_proj, num_heads):
    B, N, C = x.shape
    D = C // num_heads
    scale = float(D) ** -0.5
    qkv = x @ w_qkv.T
    qkv = qkv.reshape(B, N, 3, num_heads, D).transpose(2, 0, 3, 1, 4)
    q, k, v = qkv[0], qkv[1], qkv[2]
    attn = jax.nn.softmax((q * scale) @ jnp.swapaxes(k, -2, -1), axis=-1)
    out = (attn @ v).transpose(0, 2, 1, 3).reshape(B, N, C)
    y = out @ w_proj.T + b_proj
    return y, attn


if __name__ == "__main__":
    # Small shapes consistent with the module: B=2, N=8 tokens, C=32, 8 heads.
    B, N, C, H = 2, 8, 32, 8

    key = jax.random.PRNGKey(0)
    kx, kq, kp, kb = jax.random.split(key, 4)

    x = jax.random.normal(kx, (B, N, C), dtype=jnp.float32)
    # torch nn.Linear(dim, 3*dim, bias=False): weight (3C, C)
    w_qkv = jax.random.normal(kq, (3 * C, C), dtype=jnp.float32) * 0.05
    # torch nn.Linear(dim, dim): weight (C, C), bias (C,)
    w_proj = jax.random.normal(kp, (C, C), dtype=jnp.float32) * 0.05
    b_proj = jax.random.normal(kb, (C,), dtype=jnp.float32) * 0.05

    w_qkv_heads, w_proj_t, b_proj_r = prepare_params(w_qkv, w_proj, b_proj,
                                                     num_heads=H)

    fwd = jax.jit(attention_forward)
    y, attn = fwd(x, w_qkv_heads, w_proj_t, b_proj_r)
    jax.block_until_ready((y, attn))

    y_ref, attn_ref = attention_reference(x, w_qkv, w_proj, b_proj, H)
    assert y.shape == (B, N, C) and attn.shape == (B, H, N, N)
    assert jnp.allclose(attn, attn_ref, atol=2e-3, rtol=2e-3), \
        float(jnp.max(jnp.abs(attn - attn_ref)))
    assert jnp.allclose(y, y_ref, atol=2e-3, rtol=2e-3), \
        float(jnp.max(jnp.abs(y - y_ref)))

    print("KERNEL_OK")
</pallas_src>

<mosaic_0001>
module attributes {stable_mosaic.version = 11 : i64} {
  func.func @_fused_attn_kernel(%arg0: i32, %arg1: i32, %arg2: memref<1x8x32xf32, #tpu.memory_space<vmem>>, %arg3: memref<24x32x4xf32, #tpu.memory_space<vmem>>, %arg4: memref<1x1x8x4xf32, #tpu.memory_space<vmem>>, %arg5: memref<1x1x8x8xf32, #tpu.memory_space<vmem>>) attributes {dimension_semantics = [#tpu.dimension_semantics<parallel>, #tpu.dimension_semantics<parallel>], iteration_bounds = array<i64: 2, 8>, scalar_prefetch = 0 : i64, scratch_operands = 0 : i64, tpu.core_type = #tpu.core_type<tc>, window_params = [{transform_indices = @transform_0, window_bounds = array<i64: 1, 8, 32>}, {pipeline_mode = #tpu.pipeline_mode<synchronous>, transform_indices = @transform_1, window_bounds = array<i64: 24, 32, 4>}, {transform_indices = @transform_2, window_bounds = array<i64: 1, 1, 8, 4>}, {transform_indices = @transform_3, window_bounds = array<i64: 1, 1, 8, 8>}]} {
    %c0 = arith.constant 0 : index
    %c0_0 = arith.constant 0 : index
    %c0_1 = arith.constant 0 : index
    %0 = vector.load %arg2[%c0, %c0_0, %c0_1] : memref<1x8x32xf32, #tpu.memory_space<vmem>>, vector<1x8x32xf32>
    %1 = vector.shape_cast %0 : vector<1x8x32xf32> to vector<8x32xf32>
    %2 = arith.index_cast %arg1 : i32 to index
    %c0_2 = arith.constant 0 : index
    %c0_3 = arith.constant 0 : index
    %3 = vector.load %arg3[%2, %c0_2, %c0_3] : memref<24x32x4xf32, #tpu.memory_space<vmem>>, vector<1x32x4xf32>
    %4 = vector.shape_cast %3 : vector<1x32x4xf32> to vector<32x4xf32>
    %c8_i32 = arith.constant 8 : i32
    %5 = arith.addi %c8_i32, %arg1 : i32
    %6 = arith.index_cast %5 : i32 to index
    %c0_4 = arith.constant 0 : index
    %c0_5 = arith.constant 0 : index
    %7 = vector.load %arg3[%6, %c0_4, %c0_5] : memref<24x32x4xf32, #tpu.memory_space<vmem>>, vector<1x32x4xf32>
    %8 = vector.shape_cast %7 : vector<1x32x4xf32> to vector<32x4xf32>
    %c16_i32 = arith.constant 16 : i32
    %9 = arith.addi %c16_i32, %arg1 : i32
    %10 = arith.index_cast %9 : i32 to index
    %c0_6 = arith.constant 0 : index
    %c0_7 = arith.constant 0 : index
    %11 = vector.load %arg3[%10, %c0_6, %c0_7] : memref<24x32x4xf32, #tpu.memory_space<vmem>>, vector<1x32x4xf32>
    %12 = vector.shape_cast %11 : vector<1x32x4xf32> to vector<32x4xf32>
    %cst = arith.constant dense<0.000000e+00> : vector<8x4xf32>
    %13 = tpu.matmul %1, %4, %cst {dimension_numbers = #tpu.dot_dimension_numbers<[1], [0], [0], [1], [0, 0, 1, 1], [], []>} : vector<8x32xf32>, vector<32x4xf32>, vector<8x4xf32> -> vector<8x4xf32>
    %cst_8 = arith.constant dense<0.000000e+00> : vector<8x4xf32>
    %14 = tpu.matmul %1, %8, %cst_8 {dimension_numbers = #tpu.dot_dimension_numbers<[1], [0], [0], [1], [0, 0, 1, 1], [], []>} : vector<8x32xf32>, vector<32x4xf32>, vector<8x4xf32> -> vector<8x4xf32>
    %cst_9 = arith.constant dense<0.000000e+00> : vector<8x4xf32>
    %15 = tpu.matmul %1, %12, %cst_9 {dimension_numbers = #tpu.dot_dimension_numbers<[1], [0], [0], [1], [0, 0, 1, 1], [], []>} : vector<8x32xf32>, vector<32x4xf32>, vector<8x4xf32> -> vector<8x4xf32>
    %cst_10 = arith.constant dense<0.000000e+00> : vector<8x8xf32>
    %16 = tpu.matmul %13, %14, %cst_10 {dimension_numbers = #tpu.dot_dimension_numbers<[1], [1], [0], [0], [0, 0, 1, 0], [], []>} : vector<8x4xf32>, vector<8x4xf32>, vector<8x8xf32> -> vector<8x8xf32>
    %cst_11 = arith.constant dense<0xFF800000> : vector<8xf32>
    %17 = vector.multi_reduction <maximumf>, %16, %cst_11 [1] : vector<8x8xf32> to vector<8xf32>
    %18 = vector.shape_cast %17 : vector<8xf32> to vector<8x1xf32>
    %19 = vector.broadcast %18 : vector<8x1xf32> to vector<8x8xf32>
    %20 = arith.subf %16, %19 : vector<8x8xf32>
    %21 = math.exp %20 : vector<8x8xf32>
    %cst_12 = arith.constant dense<0.000000e+00> : vector<8xf32>
    %22 = vector.multi_reduction <add>, %21, %cst_12 [1] : vector<8x8xf32> to vector<8xf32>
    %23 = vector.shape_cast %22 : vector<8xf32> to vector<8x1xf32>
    %cst_13 = arith.constant 1.000000e+00 : f32
    %24 = vector.broadcast %cst_13 : f32 to vector<8x1xf32>
    %25 = arith.divf %24, %23 : vector<8x1xf32>
    %26 = vector.broadcast %25 : vector<8x1xf32> to vector<8x8xf32>
    %27 = arith.mulf %21, %26 : vector<8x8xf32>
    %c0_14 = arith.constant 0 : index
    %c0_15 = arith.constant 0 : index
    %c0_16 = arith.constant 0 : index
    %c0_17 = arith.constant 0 : index
    %28 = vector.load %arg5[%c0_14, %c0_15, %c0_16, %c0_17] : memref<1x1x8x8xf32, #tpu.memory_space<vmem>>, vector<1x1x8x8xf32>
    %29 = vector.shape_cast %28 : vector<1x1x8x8xf32> to vector<8x8xf32>
    %30 = vector.shape_cast %27 : vector<8x8xf32> to vector<1x1x8x8xf32>
    tpu.vector_store %arg5[%c0_14, %c0_15, %c0_16, %c0_17], %30 {strides = array<i32>} : memref<1x1x8x8xf32, #tpu.memory_space<vmem>>, vector<1x1x8x8xf32>,
    %cst_18 = arith.constant dense<0.000000e+00> : vector<8x4xf32>
    %31 = tpu.matmul %27, %15, %cst_18 {dimension_numbers = #tpu.dot_dimension_numbers<[1], [0], [0], [1], [0, 0, 1, 1], [], []>} : vector<8x8xf32>, vector<8x4xf32>, vector<8x4xf32> -> vector<8x4xf32>
    %c0_19 = arith.constant 0 : index
    %c0_20 = arith.constant 0 : index
    %c0_21 = arith.constant 0 : index
    %c0_22 = arith.constant 0 : index
    %32 = vector.load %arg4[%c0_19, %c0_20, %c0_21, %c0_22] : memref<1x1x8x4xf32, #tpu.memory_space<vmem>>, vector<1x1x8x4xf32>
    %33 = vector.shape_cast %32 : vector<1x1x8x4xf32> to vector<8x4xf32>
    %34 = vector.shape_cast %31 : vector<8x4xf32> to vector<1x1x8x4xf32>
    tpu.vector_store %arg4[%c0_19, %c0_20, %c0_21, %c0_22], %34 {strides = array<i32>} : memref<1x1x8x4xf32, #tpu.memory_space<vmem>>, vector<1x1x8x4xf32>,
    return
  }
  func.func @transform_0(%arg0: i32, %arg1: i32) -> (i32, i32, i32) {
    %c0_i32 = arith.constant 0 : i32
    %c0_i32_0 = arith.constant 0 : i32
    %c0_i32_1 = arith.constant 0 : i32
    return %arg0, %c0_i32, %c0_i32_0 : i32, i32, i32
  }
  func.func @transform_1(%arg0: i32, %arg1: i32) -> (i32, i32, i32) {
    %c0_i32 = arith.constant 0 : i32
    %c0_i32_0 = arith.constant 0 : i32
    %c0_i32_1 = arith.constant 0 : i32
    %c0_i32_2 = arith.constant 0 : i32
    return %c0_i32, %c0_i32_0, %c0_i32_1 : i32, i32, i32
  }
  func.func @transform_2(%arg0: i32, %arg1: i32) -> (i32, i32, i32, i32) {
    %c0_i32 = arith.constant 0 : i32
    %c0_i32_0 = arith.constant 0 : i32
    %c0_i32_1 = arith.constant 0 : i32
    return %arg0, %arg1, %c0_i32, %c0_i32_0 : i32, i32, i32, i32
  }
  func.func @transform_3(%arg0: i32, %arg1: i32) -> (i32, i32, i32, i32) {
    %c0_i32 = arith.constant 0 : i32
    %c0_i32_0 = arith.constant 0 : i32
    %c0_i32_1 = arith.constant 0 : i32
    return %arg0, %arg1, %c0_i32, %c0_i32_0 : i32, i32, i32, i32
  }
}

module attributes {stable_mosaic.version = 11 : i64} {
  func.func @_matmul_bias_kernel(%arg0: i32, %arg1: i32, %arg2: i32, %arg3: memref<16x32xf32, #tpu.memory_space<vmem>>, %arg4: memref<32x32xf32, #tpu.memory_space<vmem>>, %arg5: memref<1x32xf32, #tpu.memory_space<vmem>>, %arg6: memref<16x32xf32, #tpu.memory_space<vmem>>, %arg7: memref<16x32xf32, #tpu.memory_space<vmem>>) attributes {dimension_semantics = [#tpu.dimension_semantics<parallel>, #tpu.dimension_semantics<parallel>, #tpu.dimension_semantics<arbitrary>], iteration_bounds = array<i64: 1, 1, 1>, scalar_prefetch = 0 : i64, scratch_operands = 1 : i64, tpu.core_type = #tpu.core_type<tc>, window_params = [{transform_indices = @transform_0, window_bounds = array<i64: 16, 32>}, {transform_indices = @transform_1, window_bounds = array<i64: 32, 32>}, {transform_indices = @transform_2, window_bounds = array<i64: 1, 32>}, {transform_indices = @transform_3, window_bounds = array<i64: 16, 32>}]} {
    %c0_i32 = arith.constant 0 : i32
    %0 = arith.cmpi eq, %arg2, %c0_i32 : i32
    %1 = arith.extui %0 : i1 to i32
    %c0_i32_0 = arith.constant 0 : i32
    %2 = arith.cmpi ne, %1, %c0_i32_0 : i32
    scf.if %2 {
      %cst_10 = arith.constant 0.000000e+00 : f32
      %12 = vector.broadcast %cst_10 : f32 to vector<16x32xf32>
      %c0_11 = arith.constant 0 : index
      %c0_12 = arith.constant 0 : index
      %13 = vector.load %arg7[%c0_11, %c0_12] : memref<16x32xf32, #tpu.memory_space<vmem>>, vector<16x32xf32>
      tpu.vector_store %arg7[%c0_11, %c0_12], %12 {strides = array<i32>} : memref<16x32xf32, #tpu.memory_space<vmem>>, vector<16x32xf32>,
    } else {
    }
    %c0 = arith.constant 0 : index
    %c0_1 = arith.constant 0 : index
    %3 = vector.load %arg7[%c0, %c0_1] : memref<16x32xf32, #tpu.memory_space<vmem>>, vector<16x32xf32>
    %c0_2 = arith.constant 0 : index
    %c0_3 = arith.constant 0 : index
    %4 = vector.load %arg3[%c0_2, %c0_3] : memref<16x32xf32, #tpu.memory_space<vmem>>, vector<16x32xf32>
    %c0_4 = arith.constant 0 : index
    %c0_5 = arith.constant 0 : index
    %5 = vector.load %arg4[%c0_4, %c0_5] : memref<32x32xf32, #tpu.memory_space<vmem>>, vector<32x32xf32>
    %cst = arith.constant dense<0.000000e+00> : vector<16x32xf32>
    %6 = tpu.matmul %4, %5, %cst {dimension_numbers = #tpu.dot_dimension_numbers<[1], [0], [0], [1], [0, 0, 1, 1], [], []>} : vector<16x32xf32>, vector<32x32xf32>, vector<16x32xf32> -> vector<16x32xf32>
    %7 = arith.addf %3, %6 : vector<16x32xf32>
    %c0_6 = arith.constant 0 : index
    %c0_7 = arith.constant 0 : index
    %8 = vector.load %arg7[%c0_6, %c0_7] : memref<16x32xf32, #tpu.memory_space<vmem>>, vector<16x32xf32>
    tpu.vector_store %arg7[%c0_6, %c0_7], %7 {strides = array<i32>} : memref<16x32xf32, #tpu.memory_space<vmem>>, vector<16x32xf32>,
    %c0_i32_8 = arith.constant 0 : i32
    %9 = arith.cmpi eq, %arg2, %c0_i32_8 : i32
    %10 = arith.extui %9 : i1 to i32
    %c0_i32_9 = arith.constant 0 : i32
    %11 = arith.cmpi ne, %10, %c0_i32_9 : i32
    scf.if %11 {
      %c0_10 = arith.constant 0 : index
      %c0_11 = arith.constant 0 : index
      %12 = vector.load %arg7[%c0_10, %c0_11] : memref<16x32xf32, #tpu.memory_space<vmem>>, vector<16x32xf32>
      %c0_12 = arith.constant 0 : index
      %c0_13 = arith.constant 0 : index
      %13 = vector.load %arg5[%c0_12, %c0_13] : memref<1x32xf32, #tpu.memory_space<vmem>>, vector<1x32xf32>
      %14 = vector.broadcast %13 : vector<1x32xf32> to vector<16x32xf32>
      %15 = arith.addf %12, %14 : vector<16x32xf32>
      %c0_14 = arith.constant 0 : index
      %c0_15 = arith.constant 0 : index
      %16 = vector.load %arg6[%c0_14, %c0_15] : memref<16x32xf32, #tpu.memory_space<vmem>>, vector<16x32xf32>
      tpu.vector_store %arg6[%c0_14, %c0_15], %15 {strides = array<i32>} : memref<16x32xf32, #tpu.memory_space<vmem>>, vector<16x32xf32>,
    } else {
    }
    return
  }
  func.func @transform_0(%arg0: i32, %arg1: i32, %arg2: i32) -> (i32, i32) {
    %c0_i32 = arith.constant 0 : i32
    return %arg0, %arg2 : i32, i32
  }
  func.func @transform_1(%arg0: i32, %arg1: i32, %arg2: i32) -> (i32, i32) {
    %c0_i32 = arith.constant 0 : i32
    return %arg2, %arg1 : i32, i32
  }
  func.func @transform_2(%arg0: i32, %arg1: i32, %arg2: i32) -> (i32, i32) {
    %c0_i32 = arith.constant 0 : i32
    %c0_i32_0 = arith.constant 0 : i32
    return %c0_i32, %arg1 : i32, i32
  }
  func.func @transform_3(%arg0: i32, %arg1: i32, %arg2: i32) -> (i32, i32) {
    %c0_i32 = arith.constant 0 : i32
    return %arg0, %arg1 : i32, i32
  }
}

</mosaic_0001>

<llo_original>
// kernel: attention_forward.3
$region0: #{attention_forward.3}
  #allocation0 [shape = 'u32[]', space=smem, size = 0x4, offset = 0x4, fixed_abs, tag = 'smem constant byte address 0x4 - core index']
  #allocation1 [shape = 'u32[144,128]{1,0:T(1,128)}', space=vmem, size = 0x12000, scoped, tag = 'internal scratch']
  #allocation2 [shape = 'f32[16,32]{1,0:T(8,128)}', space=vmem, size = 0x2000, scoped, tag = 'scratch operand']
  %s0 = inlined_call_operand.vmem [shape: f32[16,32], index: 0, kind: input, shape index: {}]
  %s1 = inlined_call_operand.vmem [shape: f32[32,32], index: 1, kind: input, shape index: {}]
  %s2 = inlined_call_operand.vmem [shape: f32[1,32], index: 2, kind: input, shape index: {}]
  %s3 = inlined_call_operand.hbm [shape: f32[16,32], index: 3, kind: output, shape index: {}]
  %s4 = sld [smem:[#allocation0]]
  $region30: #{attention_forward.3} parent=0
    _
  %s6 = ssub.s32 1, %s4
  %s7 = scalar_select 0, %s6, %s4
  $region1: #{attention_forward.3} parent=0
    #allocation3 [shape = 'u8[8192]{0}', space=vmem, size = 0x2000, scoped, tag = 'output window, operand 0, single buffered']
    #allocation4 [shape = 's32[1]{0}', space=sflag, size = 0x4, scoped, tag = 'scoped memory for attention_forward.3']
    %8 = vsyncpa [#allocation4], 0
    // Predicated region
    $region2: #{attention_forward.3} parent=1 // pred_check
      _
    $region3: #{attention_forward.3} parent=1 // pred_check_branch
      %10 = sbr.rel (0) target = $region5
    $region4: #{attention_forward.3} parent=1 // pred_region
      _
    $region5: #{attention_forward.3} parent=1 // pred_fallthru
      _
    // Predicated region
    $region6: #{attention_forward.3} parent=1 // pred_check
      _
    $region7: #{attention_forward.3} parent=1 // pred_check_branch
      %12 = sbr.rel (0) target = $region9
    $region8: #{attention_forward.3} parent=1 // pred_region
      _
    $region9: #{attention_forward.3} parent=1 // pred_fallthru
      _
    // Predicated region
    $region10: #{attention_forward.3} parent=1 // pred_check
      _
    $region11: #{attention_forward.3} parent=1 // pred_check_branch
      %14 = sbr.rel (0) target = $region13
    $region12: #{attention_forward.3} parent=1 // pred_region
      _
    $region13: #{attention_forward.3} parent=1 // pred_fallthru
      _
    %p15 = scmp.eq.s32.totalorder 0, 0
    // Predicated region
    $region14: #{attention_forward.3} parent=1 // pred_check
      %p16 = pneg %p15
    $region15: #{attention_forward.3} parent=1 // pred_check_branch
      %18 = sbr.rel (%p16) target = $region17
    $region16: #{attention_forward.3} parent=1 // pred_region
      %vm19 = vcmask 261120
      %20 = vst.msk [vmem:[#allocation2] sm:$0xff] %vm19, 0.0
      %21 = vst.msk [vmem:[#allocation2 + $0x8] sm:$0xff] %vm19, 0.0
    $region17: #{attention_forward.3} parent=1 // pred_fallthru
      _
    %v22 = vld [vmem:[#allocation2] sm:$0xff]
    %v23 = vld [vmem:[#allocation2 + $0x8] sm:$0xff]
    %v24 = vld [vmem:[%s0] sm:$0xff]
    %v25 = vld [vmem:[%s0 + $0x8] sm:$0xff]
    %v26 = vld [vmem:[%s1] sm:$0xff]
    %v27 = vld [vmem:[%s1 + $0x8] sm:$0xff]
    %v28 = vld [vmem:[%s1 + $0x10] sm:$0xff]
    %v29 = vld [vmem:[%s1 + $0x18] sm:$0xff]
    %vm30 = vcmask 261120
    %v32 = vsel %vm30, %v24, 0
    %v35 = vsel %vm30, %v25, 0
    %37 = vmatprep.subr.mxu0 0.0
    %38 = vmatpush1.msra.mxu0 0.0
    %39 = vmatprep.subr.mxu0 0.0
    %40 = vmatpush1.msra.mxu0 0.0
    %41 = vmatprep.subr.mxu0 0.0
    %42 = vmatpush1.msra.mxu0 0.0
    %43 = vmatprep.subr.mxu0 0.0
    %44 = vmatpush1.msra.mxu0 0.0
    %45 = vmatprep.subr.mxu0 0.0
    %46 = vmatpush1.msra.mxu0 0.0
    %47 = vmatprep.subr.mxu0 0.0
    %48 = vmatpush1.msra.mxu0 0.0
    %49 = vmatprep.subr.mxu0 0.0
    %50 = vmatpush1.msra.mxu0 0.0
    %51 = vmatprep.subr.mxu0 0.0
    %52 = vmatpush1.msra.mxu0 0.0
    %53 = vmatprep.subr.mxu0 0.0
    %54 = vmatpush1.msra.mxu0 0.0
    %55 = vmatprep.subr.mxu0 0.0
    %56 = vmatpush1.msra.mxu0 0.0
    %57 = vmatprep.subr.mxu0 0.0
    %58 = vmatpush1.msra.mxu0 0.0
    %59 = vmatprep.subr.mxu0 0.0
    %60 = vmatpush1.msra.mxu0 0.0
    %61 = vmatprep.subr.mxu0 0.0
    %62 = vmatpush1.msra.mxu0 %v29
    %63 = vmatprep.subr.mxu0 0.0
    %64 = vmatpush1.msra.mxu0 %v28
    %65 = vmatprep.subr.mxu0 0.0
    %66 = vmatpush1.msra.mxu0 %v27
    %67 = vmatprep.subr.mxu0 0.0
    %68 = vmatpush1.msra.mxu0 %v26
    %69 = vmatprep.subr.mxu0 0.0
    %70 = vmatpush2.msra.mxu0 0.0
    %71 = vmatprep.subr.mxu0 0.0
    %72 = vmatpush2.msra.mxu0 0.0
    %73 = vmatprep.subr.mxu0 0.0
    %74 = vmatpush2.msra.mxu0 0.0
    %75 = vmatprep.subr.mxu0 0.0
    %76 = vmatpush2.msra.mxu0 0.0
    %77 = vmatprep.subr.mxu0 0.0
    %78 = vmatpush2.msra.mxu0 0.0
    %79 = vmatprep.subr.mxu0 0.0
    %80 = vmatpush2.msra.mxu0 0.0
    %81 = vmatprep.subr.mxu0 0.0
    %82 = vmatpush2.msra.mxu0 0.0
    %83 = vmatprep.subr.mxu0 0.0
    %84 = vmatpush2.msra.mxu0 0.0
    %85 = vmatprep.subr.mxu0 0.0
    %86 = vmatpush2.msra.mxu0 0.0
    %87 = vmatprep.subr.mxu0 0.0
    %88 = vmatpush2.msra.mxu0 0.0
    %89 = vmatprep.subr.mxu0 0.0
    %90 = vmatpush2.msra.mxu0 0.0
    %91 = vmatprep.subr.mxu0 0.0
    %92 = vmatpush2.msra.mxu0 0.0
    %93 = vmatprep.subr.mxu0 0.0
    %94 = vmatpush2.msra.mxu0 0.0
    %95 = vmatprep.subr.mxu0 0.0
    %96 = vmatpush2.msra.mxu0 0.0
    %97 = vmatprep.subr.mxu0 0.0
    %98 = vmatpush2.msra.mxu0 0.0
    %99 = vmatprep.subr.mxu0 0.0
    %100 = vmatpush2.msra.mxu0 0.0
    %101 = vmatprep.mubr.f32.mxu0 0.0
    %102 = vmatmul.mubr.f32.gmra.mxu0 %v32
    %v103 = vpop.f32.mrf.mxu0
    %v104 = vadd.f32 0.0, %v103
    %v105 = vpop.f32.mrf.mxu0
    %106 = vmatprep.mubr.f32.mxu0 0.0
    %107 = vmatmul.mubr.f32.gmra.mxu0 %v35
    %v108 = vpop.f32.mrf.mxu0
    %v109 = vadd.f32 0.0, %v108
    %v110 = vpop.f32.mrf.mxu0
    %111 = vdwg.mxu0
    %v112 = vadd.f32 %v22, %v104
    %v113 = vadd.f32 %v23, %v109
    %114 = vst.msk [vmem:[#allocation2] sm:$0xff] %vm30, %v112
    %115 = vst.msk [vmem:[#allocation2 + $0x8] sm:$0xff] %vm30, %v113
    // Predicated region
    $region18: #{attention_forward.3} parent=1 // pred_check
      %p116 = pneg %p15
    $region19: #{attention_forward.3} parent=1 // pred_check_branch
      %118 = sbr.rel (%p116) target = $region21
    $region20: #{attention_forward.3} parent=1 // pred_region
      %v119 = vld [vmem:[#allocation2] sm:$0xff]
      %v120 = vld [vmem:[#allocation2 + $0x8] sm:$0xff]
      %v121 = vld [vmem:[%s2] sm:$0x1]
      %v123 = vlaneseq
      %v124 = vshrl.u32 %v123, 7
      %v125 = vsub.s32 0, %v124
      %v126 = vrot.slane %v121, %v125
      %v128 = vadd.f32 %v119, %v126
      %v129 = vadd.f32 %v120, %v126
      %130 = vst.msk [vmem:[#allocation3] sm:$0xff] %vm30, %v128
      %131 = vst.msk [vmem:[#allocation3 + $0x8] sm:$0xff] %vm30, %v129
    $region21: #{attention_forward.3} parent=1 // pred_fallthru
      _
    // Predicated region
    $region22: #{attention_forward.3} parent=1 // pred_check
      _
    $region23: #{attention_forward.3} parent=1 // pred_check_branch
      %133 = sbr.rel (0) target = $region25
    $region24: #{attention_forward.3} parent=1 // pred_region
      %s135 = ssub.s32 256, 256
      %136 = vsyncadd [#allocation4], %s135
      %s137 = sshll.u32 [#allocation3], 4
      %s138 = int_to_ptr.vmem [resolvable:$true] %s137
      %143 = dma.vmem_to_hbm [thread:$0]  %s138, 256, %s3, [#allocation4], 128, 128, 8
    $region25: #{attention_forward.3} parent=1 // pred_fallthru
      _
    // Predicated region
    $region26: #{attention_forward.3} parent=1 // pred_check
      _
    $region27: #{attention_forward.3} parent=1 // pred_check_branch
      %145 = sbr.rel (0) target = $region29
    $region28: #{attention_forward.3} parent=1 // pred_region
      %146 = dma.done [#allocation4], 256
    $region29: #{attention_forward.3} parent=1 // pred_fallthru
      _
    %147 = vsyncpa [#allocation4], 1

// kernel: attention_forward.2
$region0: #{attention_forward.2}
  #allocation0 [shape = 'u32[]', space=smem, size = 0x4, offset = 0x4, fixed_abs, tag = 'smem constant byte address 0x4 - core index']
  #allocation1 [shape = 'u32[144,128]{1,0:T(1,128)}', space=vmem, size = 0x12000, scoped, tag = 'internal scratch']
  %s0 = inlined_call_operand.vmem [shape: f32[2,8,32], index: 0, kind: input, shape index: {}]
  %s1 = inlined_call_operand.vmem [shape: f32[24,32,4], index: 1, kind: input, shape index: {}]
  %s2 = inlined_call_operand.vmem [shape: f32[2,8,8,4], index: 2, kind: output, shape index: {0}]
  %s3 = inlined_call_operand.hbm [shape: f32[2,8,8,8], index: 3, kind: output, shape index: {1}]
  %4 = xla_tuple %s2, %s3
  %s5 = sld [smem:[#allocation0]]
  $region49: #{attention_forward.2} parent=0
    _
  %s7 = ssub.s32 1, %s5
  %s8 = scalar_select 0, %s7, %s5
  $region1: #{attention_forward.2} parent=0
    #allocation2 [shape = 'u8[8192]{0}', space=vmem, size = 0x2000, scoped, tag = 'output window, operand 1']
    #allocation3 [shape = 's32[2]{0}', space=sflag, size = 0x8, scoped, tag = 'scoped memory for attention_forward.2']
    %9 = vsyncpa [#allocation3], 0
    %s10 = scalar_lea.sflag [#allocation3], 1
    %11 = vsyncpa %s10, 0
    loop: start=0, step=1, limit=18
    $region2: #{attention_forward.2} parent=1 // loop_pre_header
      _
    $region3: #{attention_forward.2} parent=1 // loop_header
      %s13 = sphi 0, %s17
      %p14 = scmp.ge.s32.totalorder %s13, 18
      %s20 = sphi 0, %s32
      %s21 = sphi 0, %s28
      %s22 = sphi 0, %s20
      %s23 = sphi 0, %s21
      %s24 = sphi 0, %s22
      %s25 = sphi 0, %s23
      %s35 = sphi 0, %s37
      %s38 = sphi 0, %s35
      %s39 = sphi 0, %s38
      %s55 = sphi 0, %s39
      %s59 = sphi 0, %s59
      %s61 = sphi 0, %s59
      %s62 = sphi 0, %s61
      %s76 = sphi 0, %s62
      %s84 = sphi 0, %s86
      %s87 = sphi 0, %s84
      %s88 = sphi 0, %s87
      %s104 = sphi 0, %s88
      %s112 = sphi 0, %s114
      %s115 = sphi 0, %s112
      %s116 = sphi 0, %s115
      %s132 = sphi 0, %s116
    $region4: #{attention_forward.2} parent=1 // loop_header_branch
      %16 = sbr.rel (%p14) target = $region8
    $region5: #{attention_forward.2} parent=1 // loop_body
      %s18 = ssub.s32 %s13, 1
      %s19 = ssub.s32 %s13, 2
      %s26 = sadd.s32 1, %s21
      %p27 = scmp.ge.s32.totalorder %s26, 8
      %s28 = scalar_select %p27, 0, %s26
      %s29 = sadd.s32 1, %s20
      %s30 = scalar_select %p27, %s29, %s20
      %p31 = scmp.ge.s32.totalorder %s30, 2
      %s32 = scalar_select %p31, 0, %s30
      %s33 = ssub.s32 %s20, %s32
      %p34 = scmp.eq.s32.totalorder %s33, 0
      %s36 = sadd.s32 %s35, 1
      %s37 = scalar_select %p34, %s35, %s36
      %p40 = pneg %p34
      %p41 = scmp.eq.s32.totalorder %s13, 15
      %p42 = por %p40, %p41
      %p43 = scmp.ne.s32.totalorder %s35, %s38
      %p44 = scmp.eq.s32.totalorder %s13, 0
      %p45 = por %p43, %p44
      %p46 = scmp.ne.s32.totalorder %s35, %s38
      %p47 = scmp.eq.s32.totalorder %s18, 15
      %p48 = por %p46, %p47
      %p49 = scmp.ne.s32.totalorder %s38, %s39
      %p50 = scmp.eq.s32.totalorder %s18, 0
      %p51 = por %p49, %p50
      %p52 = scmp.ne.s32.totalorder %s38, %s39
      %p53 = scmp.eq.s32.totalorder %s19, 15
      %p54 = por %p52, %p53
      %p56 = scmp.ne.s32.totalorder %s39, %s55
      %p57 = scmp.eq.s32.totalorder %s19, 0
      %p58 = por %p56, %p57
      %s60 = sadd.s32 %s59, 1
      %p63 = scmp.eq.s32.totalorder %s13, 15
      %p64 = scmp.ne.s32.totalorder %s59, %s61
      %p65 = scmp.eq.s32.totalorder %s13, 0
      %p66 = por %p64, %p65
      %p67 = scmp.ne.s32.totalorder %s59, %s61
      %p68 = scmp.eq.s32.totalorder %s18, 15
      %p69 = por %p67, %p68
      %p70 = scmp.ne.s32.totalorder %s61, %s62
      %p71 = scmp.eq.s32.totalorder %s18, 0
      %p72 = por %p70, %p71
      %p73 = scmp.ne.s32.totalorder %s61, %s62
      %p74 = scmp.eq.s32.totalorder %s19, 15
      %p75 = por %p73, %p74
      %p77 = scmp.ne.s32.totalorder %s62, %s76
      %p78 = scmp.eq.s32.totalorder %s19, 0
      %p79 = por %p77, %p78
      %s80 = ssub.s32 %s20, %s32
      %s81 = ssub.s32 %s21, %s28
      %s82 = sor.u32 %s80, %s81
      %p83 = scmp.eq.s32.totalorder %s82, 0
      %s85 = sadd.s32 %s84, 1
      %s86 = scalar_select %p83, %s84, %s85
      %p89 = pneg %p83
      %p90 = scmp.eq.s32.totalorder %s13, 15
      %p91 = por %p89, %p90
      %p92 = scmp.ne.s32.totalorder %s84, %s87
      %p93 = scmp.eq.s32.totalorder %s13, 0
      %p94 = por %p92, %p93
      %p95 = scmp.ne.s32.totalorder %s84, %s87
      %p96 = scmp.eq.s32.totalorder %s18, 15
      %p97 = por %p95, %p96
      %p98 = scmp.ne.s32.totalorder %s87, %s88
      %p99 = scmp.eq.s32.totalorder %s18, 0
      %p100 = por %p98, %p99
      %p101 = scmp.ne.s32.totalorder %s87, %s88
      %p102 = scmp.eq.s32.totalorder %s19, 15
      %p103 = por %p101, %p102
      %p105 = scmp.ne.s32.totalorder %s88, %s104
      %p106 = scmp.eq.s32.totalorder %s19, 0
      %p107 = por %p105, %p106
      %s108 = ssub.s32 %s20, %s32
      %s109 = ssub.s32 %s21, %s28
      %s110 = sor.u32 %s108, %s109
      %p111 = scmp.eq.s32.totalorder %s110, 0
      %s113 = sadd.s32 %s112, 1
      %s114 = scalar_select %p111, %s112, %s113
      %p117 = pneg %p111
      %p118 = scmp.eq.s32.totalorder %s13, 15
      %p119 = por %p117, %p118
      %p120 = scmp.ne.s32.totalorder %s112, %s115
      %p121 = scmp.eq.s32.totalorder %s13, 0
      %p122 = por %p120, %p121
      %p123 = scmp.ne.s32.totalorder %s112, %s115
      %p124 = scmp.eq.s32.totalorder %s18, 15
      %p125 = por %p123, %p124
      %p126 = scmp.ne.s32.totalorder %s115, %s116
      %p127 = scmp.eq.s32.totalorder %s18, 0
      %p128 = por %p126, %p127
      %p129 = scmp.ne.s32.totalorder %s115, %s116
      %p130 = scmp.eq.s32.totalorder %s19, 15
      %p131 = por %p129, %p130
      %p133 = scmp.ne.s32.totalorder %s116, %s132
      %p134 = scmp.eq.s32.totalorder %s19, 0
      %p135 = por %p133, %p134
      %p136 = scmp.le.s32.totalorder 1, %s13
      %p137 = scmp.lt.s32.totalorder %s13, 17
      %p138 = pnand %p136, %p137
      %p139 = pneg %p138
      // Predicated region
      $region9: #{attention_forward.2} parent=5 // pred_check
        _
      $region10: #{attention_forward.2} parent=5 // pred_check_branch
        %141 = sbr.rel (%p138) target = $region12
      $region11: #{attention_forward.2} parent=5 // pred_region
        %s142 = ssub.s32 %s13, 1
        // Predicated region
        $region13: #{attention_forward.2} parent=11 // pred_check
          %p143 = pneg %p72
        $region14: #{attention_forward.2} parent=11 // pred_check_branch
          %145 = sbr.rel (%p143) target = $region16
        $region15: #{attention_forward.2} parent=11 // pred_region
          _
        $region16: #{attention_forward.2} parent=11 // pred_fallthru
          _
      $region12: #{attention_forward.2} parent=5 // pred_fallthru
        _
      %p146 = scmp.lt.s32.totalorder %s13, 16
      // Predicated region
      $region17: #{attention_forward.2} parent=5 // pred_check
        %p147 = pneg %p146
      $region18: #{attention_forward.2} parent=5 // pred_check_branch
        %149 = sbr.rel (%p147) target = $region20
      $region19: #{attention_forward.2} parent=5 // pred_region
        // Predicated region
        $region21: #{attention_forward.2} parent=19 // pred_check
          %p150 = pneg %p45
        $region22: #{attention_forward.2} parent=19 // pred_check_branch
          %152 = sbr.rel (%p150) target = $region24
        $region23: #{attention_forward.2} parent=19 // pred_region
          %p153 = scmp.lt.s32.totalorder %s20, 1
          %s154 = scalar_select %p153, %s20, 1
          %s155 = smul.addr %s154, 8
          %s156 = scalar_lea.vmem %s0, %s155
        $region24: #{attention_forward.2} parent=19 // pred_fallthru
          _
      $region20: #{attention_forward.2} parent=5 // pred_fallthru
        _
      %p157 = scmp.le.s32.totalorder 1, %s13
      %p158 = scmp.lt.s32.totalorder %s13, 17
      %p159 = pnand %p157, %p158
      %p160 = pneg %p159
      // Predicated region
      $region25: #{attention_forward.2} parent=5 // pred_check
        _
      $region26: #{attention_forward.2} parent=5 // pred_check_branch
        %162 = sbr.rel (%p159) target = $region28
      $region27: #{attention_forward.2} parent=5 // pred_region
        %s163 = ssub.s32 %s13, 1
        %p164 = scmp.lt.s32.totalorder %s22, 1
        %s165 = scalar_select %p164, %s22, 1
        %s166 = smul.addr %s165, 8
        %s167 = scalar_lea.vmem %s0, %s166
        %p168 = pneg %p51
        %p169 = pneg %p48
        %p170 = pneg %p72
        %p171 = pneg %p69
        %p172 = pneg %p100
        %p173 = pneg %p97
        %p174 = scmp.lt.s32.totalorder %s22, 1
        %s175 = scalar_select %p174, %s22, 1
        %p176 = scmp.lt.s32.totalorder %s23, 7
        %s177 = scalar_select %p176, %s23, 7
        %s178 = smul.addr %s175, 8
        %s179 = sadd.s32 %s177, %s178
        %s180 = smul.addr %s179, 8
        %s181 = scalar_lea.vmem %s2, %s180
        %p182 = pneg %p128
        %p183 = pneg %p125
        %s184 = sand.u32 %s115, 1
        %s185 = scalar_lea.sflag [#allocation3], %s184
        %s186 = sand.u32 %s115, 1
        %s187 = smul.addr %s186, 8
        %s188 = scalar_lea.vmem [#allocation2], %s187
        %p189 = scmp.lt.s32.totalorder %s22, 1
        %s190 = scalar_select %p189, %s22, 1
        %s191 = smul.addr %s190, 8
        %s192 = scalar_lea.vmem %s0, %s191
        %p193 = scmp.lt.s32.totalorder %s22, 1
        %s194 = scalar_select %p193, %s22, 1
        %p195 = scmp.lt.s32.totalorder %s23, 7
        %s196 = scalar_select %p195, %s23, 7
        %s197 = smul.addr %s194, 8
        %s198 = sadd.s32 %s196, %s197
        %s199 = smul.addr %s198, 8
        %s200 = scalar_lea.vmem %s2, %s199
        %v201 = vld [vmem:[%s192] sm:$0xff]
        %s202 = smul.u32 %s23, 32
        %s203 = scalar_lea.vmem %s1, %s202
        %v204 = vld [vmem:[%s203] sm:$0xff]
        %v205 = vld [vmem:[%s203 + $0x8] sm:$0xff]
        %v206 = vld [vmem:[%s203 + $0x10] sm:$0xff]
        %v207 = vld [vmem:[%s203 + $0x18] sm:$0xff]
        %s208 = sadd.s32 %s23, 8
        %s209 = smul.u32 %s208, 32
        %s210 = scalar_lea.vmem %s1, %s209
        %v211 = vld [vmem:[%s210] sm:$0xff]
        %v212 = vld [vmem:[%s210 + $0x8] sm:$0xff]
        %v213 = vld [vmem:[%s210 + $0x10] sm:$0xff]
        %v214 = vld [vmem:[%s210 + $0x18] sm:$0xff]
        %s215 = sadd.s32 %s23, 16
        %s216 = smul.u32 %s215, 32
        %s217 = scalar_lea.vmem %s1, %s216
        %v218 = vld [vmem:[%s217] sm:$0xff]
        %v219 = vld [vmem:[%s217 + $0x8] sm:$0xff]
        %v220 = vld [vmem:[%s217 + $0x10] sm:$0xff]
        %v221 = vld [vmem:[%s217 + $0x18] sm:$0xff]
        %vm222 = vcmask 261120
        %v224 = vsel %vm222, %v201, 0
        %226 = vmatprep.subr.mxu0 0.0
        %227 = vmatpush1.msra.mxu0 0.0
        %228 = vmatprep.subr.mxu0 0.0
        %229 = vmatpush1.msra.mxu0 0.0
        %230 = vmatprep.subr.mxu0 0.0
        %231 = vmatpush1.msra.mxu0 0.0
        %232 = vmatprep.subr.mxu0 0.0
        %233 = vmatpush1.msra.mxu0 0.0
        %234 = vmatprep.subr.mxu0 0.0
        %235 = vmatpush1.msra.mxu0 0.0
        %236 = vmatprep.subr.mxu0 0.0
        %237 = vmatpush1.msra.mxu0 0.0
        %238 = vmatprep.subr.mxu0 0.0
        %239 = vmatpush1.msra.mxu0 0.0
        %240 = vmatprep.subr.mxu0 0.0
        %241 = vmatpush1.msra.mxu0 0.0
        %242 = vmatprep.subr.mxu0 0.0
        %243 = vmatpush1.msra.mxu0 0.0
        %244 = vmatprep.subr.mxu0 0.0
        %245 = vmatpush1.msra.mxu0 0.0
        %246 = vmatprep.subr.mxu0 0.0
        %247 = vmatpush1.msra.mxu0 0.0
        %248 = vmatprep.subr.mxu0 0.0
        %249 = vmatpush1.msra.mxu0 0.0
        %250 = vmatprep.subr.mxu0 0.0
        %251 = vmatpush1.msra.mxu0 %v207
        %252 = vmatprep.subr.mxu0 0.0
        %253 = vmatpush1.msra.mxu0 %v206
        %254 = vmatprep.subr.mxu0 0.0
        %255 = vmatpush1.msra.mxu0 %v205
        %256 = vmatprep.subr.mxu0 0.0
        %257 = vmatpush1.msra.mxu0 %v204
        %258 = vmatprep.subr.mxu0 0.0
        %259 = vmatpush2.msra.mxu0 0.0
        %260 = vmatprep.subr.mxu0 0.0
        %261 = vmatpush2.msra.mxu0 0.0
        %262 = vmatprep.subr.mxu0 0.0
        %263 = vmatpush2.msra.mxu0 0.0
        %264 = vmatprep.subr.mxu0 0.0
        %265 = vmatpush2.msra.mxu0 0.0
        %266 = vmatprep.subr.mxu0 0.0
        %267 = vmatpush2.msra.mxu0 0.0
        %268 = vmatprep.subr.mxu0 0.0
        %269 = vmatpush2.msra.mxu0 0.0
        %270 = vmatprep.subr.mxu0 0.0
        %271 = vmatpush2.msra.mxu0 0.0
        %272 = vmatprep.subr.mxu0 0.0
        %273 = vmatpush2.msra.mxu0 0.0
        %274 = vmatprep.subr.mxu0 0.0
        %275 = vmatpush2.msra.mxu0 0.0
        %276 = vmatprep.subr.mxu0 0.0
        %277 = vmatpush2.msra.mxu0 0.0
        %278 = vmatprep.subr.mxu0 0.0
        %279 = vmatpush2.msra.mxu0 0.0
        %280 = vmatprep.subr.mxu0 0.0
        %281 = vmatpush2.msra.mxu0 0.0
        %282 = vmatprep.subr.mxu0 0.0
        %283 = vmatpush2.msra.mxu0 0.0
        %284 = vmatprep.subr.mxu0 0.0
        %285 = vmatpush2.msra.mxu0 0.0
        %286 = vmatprep.subr.mxu0 0.0
        %287 = vmatpush2.msra.mxu0 0.0
        %288 = vmatprep.subr.mxu0 0.0
        %289 = vmatpush2.msra.mxu0 0.0
        %290 = vmatprep.mubr.f32.mxu0 0.0
        %291 = vmatmul.mubr.f32.gmra.mxu0 %v224
        %v292 = vpop.f32.mrf.mxu0
        %v293 = vadd.f32 0.0, %v292
        %v294 = vpop.f32.mrf.mxu0
        %295 = vdwg.mxu0
        %296 = vmatprep.subr.mxu0 0.0
        %297 = vmatpush1.msra.mxu0 0.0
        %298 = vmatprep.subr.mxu0 0.0
        %299 = vmatpush1.msra.mxu0 0.0
        %300 = vmatprep.subr.mxu0 0.0
        %301 = vmatpush1.msra.mxu0 0.0
        %302 = vmatprep.subr.mxu0 0.0
        %303 = vmatpush1.msra.mxu0 0.0
        %304 = vmatprep.subr.mxu0 0.0
        %305 = vmatpush1.msra.mxu0 0.0
        %306 = vmatprep.subr.mxu0 0.0
        %307 = vmatpush1.msra.mxu0 0.0
        %308 = vmatprep.subr.mxu0 0.0
        %309 = vmatpush1.msra.mxu0 0.0
        %310 = vmatprep.subr.mxu0 0.0
        %311 = vmatpush1.msra.mxu0 0.0
        %312 = vmatprep.subr.mxu0 0.0
        %313 = vmatpush1.msra.mxu0 0.0
        %314 = vmatprep.subr.mxu0 0.0
        %315 = vmatpush1.msra.mxu0 0.0
        %316 = vmatprep.subr.mxu0 0.0
        %317 = vmatpush1.msra.mxu0 0.0
        %318 = vmatprep.subr.mxu0 0.0
        %319 = vmatpush1.msra.mxu0 0.0
        %320 = vmatprep.subr.mxu0 0.0
        %321 = vmatpush1.msra.mxu0 %v214
        %322 = vmatprep.subr.mxu0 0.0
        %323 = vmatpush1.msra.mxu0 %v213
        %324 = vmatprep.subr.mxu0 0.0
        %325 = vmatpush1.msra.mxu0 %v212
        %326 = vmatprep.subr.mxu0 0.0
        %327 = vmatpush1.msra.mxu0 %v211
        %328 = vmatprep.subr.mxu0 0.0
        %329 = vmatpush2.msra.mxu0 0.0
        %330 = vmatprep.subr.mxu0 0.0
        %331 = vmatpush2.msra.mxu0 0.0
        %332 = vmatprep.subr.mxu0 0.0
        %333 = vmatpush2.msra.mxu0 0.0
        %334 = vmatprep.subr.mxu0 0.0
        %335 = vmatpush2.msra.mxu0 0.0
        %336 = vmatprep.subr.mxu0 0.0
        %337 = vmatpush2.msra.mxu0 0.0
        %338 = vmatprep.subr.mxu0 0.0
        %339 = vmatpush2.msra.mxu0 0.0
        %340 = vmatprep.subr.mxu0 0.0
        %341 = vmatpush2.msra.mxu0 0.0
        %342 = vmatprep.subr.mxu0 0.0
        %343 = vmatpush2.msra.mxu0 0.0
        %344 = vmatprep.subr.mxu0 0.0
        %345 = vmatpush2.msra.mxu0 0.0
        %346 = vmatprep.subr.mxu0 0.0
        %347 = vmatpush2.msra.mxu0 0.0
        %348 = vmatprep.subr.mxu0 0.0
        %349 = vmatpush2.msra.mxu0 0.0
        %350 = vmatprep.subr.mxu0 0.0
        %351 = vmatpush2.msra.mxu0 0.0
        %352 = vmatprep.subr.mxu0 0.0
        %353 = vmatpush2.msra.mxu0 0.0
        %354 = vmatprep.subr.mxu0 0.0
        %355 = vmatpush2.msra.mxu0 0.0
        %356 = vmatprep.subr.mxu0 0.0
        %357 = vmatpush2.msra.mxu0 0.0
        %358 = vmatprep.subr.mxu0 0.0
        %359 = vmatpush2.msra.mxu0 0.0
        %360 = vmatprep.mubr.f32.mxu0 0.0
        %361 = vmatmul.mubr.f32.gmra.mxu0 %v224
        %v362 = vpop.f32.mrf.mxu0
        %v363 = vadd.f32 0.0, %v362
        %v364 = vpop.f32.mrf.mxu0
        %365 = vdwg.mxu0
        %366 = vmatprep.subr.mxu0 0.0
        %367 = vmatpush1.msra.mxu0 0.0
        %368 = vmatprep.subr.mxu0 0.0
        %369 = vmatpush1.msra.mxu0 0.0
        %370 = vmatprep.subr.mxu0 0.0
        %371 = vmatpush1.msra.mxu0 0.0
        %372 = vmatprep.subr.mxu0 0.0
        %373 = vmatpush1.msra.mxu0 0.0
        %374 = vmatprep.subr.mxu0 0.0
        %375 = vmatpush1.msra.mxu0 0.0
        %376 = vmatprep.subr.mxu0 0.0
        %377 = vmatpush1.msra.mxu0 0.0
        %378 = vmatprep.subr.mxu0 0.0
        %379 = vmatpush1.msra.mxu0 0.0
        %380 = vmatprep.subr.mxu0 0.0
        %381 = vmatpush1.msra.mxu0 0.0
        %382 = vmatprep.subr.mxu0 0.0
        %383 = vmatpush1.msra.mxu0 0.0
        %384 = vmatprep.subr.mxu0 0.0
        %385 = vmatpush1.msra.mxu0 0.0
        %386 = vmatprep.subr.mxu0 0.0
        %387 = vmatpush1.msra.mxu0 0.0
        %388 = vmatprep.subr.mxu0 0.0
        %389 = vmatpush1.msra.mxu0 0.0
        %390 = vmatprep.subr.mxu0 0.0
        %391 = vmatpush1.msra.mxu0 %v221
        %392 = vmatprep.subr.mxu0 0.0
        %393 = vmatpush1.msra.mxu0 %v220
        %394 = vmatprep.subr.mxu0 0.0
        %395 = vmatpush1.msra.mxu0 %v219
        %396 = vmatprep.subr.mxu0 0.0
        %397 = vmatpush1.msra.mxu0 %v218
        %398 = vmatprep.subr.mxu0 0.0
        %399 = vmatpush2.msra.mxu0 0.0
        %400 = vmatprep.subr.mxu0 0.0
        %401 = vmatpush2.msra.mxu0 0.0
        %402 = vmatprep.subr.mxu0 0.0
        %403 = vmatpush2.msra.mxu0 0.0
        %404 = vmatprep.subr.mxu0 0.0
        %405 = vmatpush2.msra.mxu0 0.0
        %406 = vmatprep.subr.mxu0 0.0
        %407 = vmatpush2.msra.mxu0 0.0
        %408 = vmatprep.subr.mxu0 0.0
        %409 = vmatpush2.msra.mxu0 0.0
        %410 = vmatprep.subr.mxu0 0.0
        %411 = vmatpush2.msra.mxu0 0.0
        %412 = vmatprep.subr.mxu0 0.0
        %413 = vmatpush2.msra.mxu0 0.0
        %414 = vmatprep.subr.mxu0 0.0
        %415 = vmatpush2.msra.mxu0 0.0
        %416 = vmatprep.subr.mxu0 0.0
        %417 = vmatpush2.msra.mxu0 0.0
        %418 = vmatprep.subr.mxu0 0.0
        %419 = vmatpush2.msra.mxu0 0.0
        %420 = vmatprep.subr.mxu0 0.0
        %421 = vmatpush2.msra.mxu0 0.0
        %422 = vmatprep.subr.mxu0 0.0
        %423 = vmatpush2.msra.mxu0 0.0
        %424 = vmatprep.subr.mxu0 0.0
        %425 = vmatpush2.msra.mxu0 0.0
        %426 = vmatprep.subr.mxu0 0.0
        %427 = vmatpush2.msra.mxu0 0.0
        %428 = vmatprep.subr.mxu0 0.0
        %429 = vmatpush2.msra.mxu0 0.0
        %430 = vmatprep.mubr.f32.mxu0 0.0
        %431 = vmatmul.mubr.f32.gmra.mxu0 %v224
        %v432 = vpop.f32.mrf.mxu0
        %v433 = vadd.f32 0.0, %v432
        %v434 = vpop.f32.mrf.mxu0
        %435 = vdwg.mxu0
        %vm436 = vcmask 31744
        %v438 = vsel %vm436, %v293, 0
        %v441 = vsel %vm436, %v363, 0
        %443 = vmatprep.subr.mxu0 0.0
        %444 = vmatpush1.xpose.msra.mxu0 0.0
        %445 = vmatprep.subr.mxu0 0.0
        %446 = vmatpush1.xpose.msra.mxu0 0.0
        %447 = vmatprep.subr.mxu0 0.0
        %448 = vmatpush1.xpose.msra.mxu0 0.0
        %449 = vmatprep.subr.mxu0 0.0
        %450 = vmatpush1.xpose.msra.mxu0 0.0
        %451 = vmatprep.subr.mxu0 0.0
        %452 = vmatpush1.xpose.msra.mxu0 0.0
        %453 = vmatprep.subr.mxu0 0.0
        %454 = vmatpush1.xpose.msra.mxu0 0.0
        %455 = vmatprep.subr.mxu0 0.0
        %456 = vmatpush1.xpose.msra.mxu0 0.0
        %457 = vmatprep.subr.mxu0 0.0
        %458 = vmatpush1.xpose.msra.mxu0 0.0
        %459 = vmatprep.subr.mxu0 0.0
        %460 = vmatpush1.xpose.msra.mxu0 0.0
        %461 = vmatprep.subr.mxu0 0.0
        %462 = vmatpush1.xpose.msra.mxu0 0.0
        %463 = vmatprep.subr.mxu0 0.0
        %464 = vmatpush1.xpose.msra.mxu0 0.0
        %465 = vmatprep.subr.mxu0 0.0
        %466 = vmatpush1.xpose.msra.mxu0 0.0
        %467 = vmatprep.subr.mxu0 0.0
        %468 = vmatpush1.xpose.msra.mxu0 0.0
        %469 = vmatprep.subr.mxu0 0.0
        %470 = vmatpush1.xpose.msra.mxu0 0.0
        %471 = vmatprep.subr.mxu0 0.0
        %472 = vmatpush1.xpose.msra.mxu0 0.0
        %473 = vmatprep.subr.mxu0 0.0
        %474 = vmatpush1.xpose.msra.mxu0 %v441
        %475 = vmatprep.subr.mxu0 0.0
        %476 = vmatpush2.xpose.msra.mxu0 0.0
        %477 = vmatprep.subr.mxu0 0.0
        %478 = vmatpush2.xpose.msra.mxu0 0.0
        %479 = vmatprep.subr.mxu0 0.0
        %480 = vmatpush2.xpose.msra.mxu0 0.0
        %481 = vmatprep.subr.mxu0 0.0
        %482 = vmatpush2.xpose.msra.mxu0 0.0
        %483 = vmatprep.subr.mxu0 0.0
        %484 = vmatpush2.xpose.msra.mxu0 0.0
        %485 = vmatprep.subr.mxu0 0.0
        %486 = vmatpush2.xpose.msra.mxu0 0.0
        %487 = vmatprep.subr.mxu0 0.0
        %488 = vmatpush2.xpose.msra.mxu0 0.0
        %489 = vmatprep.subr.mxu0 0.0
        %490 = vmatpush2.xpose.msra.mxu0 0.0
        %491 = vmatprep.subr.mxu0 0.0
        %492 = vmatpush2.xpose.msra.mxu0 0.0
        %493 = vmatprep.subr.mxu0 0.0
        %494 = vmatpush2.xpose.msra.mxu0 0.0
        %495 = vmatprep.subr.mxu0 0.0
        %496 = vmatpush2.xpose.msra.mxu0 0.0
        %497 = vmatprep.subr.mxu0 0.0
        %498 = vmatpush2.xpose.msra.mxu0 0.0
        %499 = vmatprep.subr.mxu0 0.0
        %500 = vmatpush2.xpose.msra.mxu0 0.0
        %501 = vmatprep.subr.mxu0 0.0
        %502 = vmatpush2.xpose.msra.mxu0 0.0
        %503 = vmatprep.subr.mxu0 0.0
        %504 = vmatpush2.xpose.msra.mxu0 0.0
        %505 = vmatprep.subr.mxu0 0.0
        %506 = vmatpush2.xpose.msra.mxu0 0.0
        %507 = vmatprep.mubr.f32.mxu0 0.0
        %508 = vmatmul.mubr.f32.gmra.mxu0 %v438
        %v509 = vpop.f32.mrf.mxu0
        %v510 = vadd.f32 0.0, %v509
        %v511 = vpop.f32.mrf.mxu0
        %512 = vdwg.mxu0
        %vm513 = vcmask 64512
        %v514 = vsel %vm513, %v510, -inf
        %515 = vmax.xlane.f32.xlu0 %v514
        %v516 = vpop.xlane.xlu0 %515
        %v517 = vsub.f32 %v510, %v516
        %v518 = vmul.f32 %v517, 1.442695
        %v519 = vpow.pop %v518
        %v520 = vsel %vm513, %v519, 0.0
        %521 = vadd.xlane.f32.xlu0 %v520
        %v522 = vpop.xlane.xlu0 %521
        %v523 = vrcp.pop %v522
        %v524 = vmul.f32 1.0, %v523
        %v525 = vmul.f32 %v519, %v524
        %526 = vst.msk [vmem:[%s188] sm:$0xff] %vm513, %v525
        %v528 = vsel %vm513, %v525, 0
        %530 = vmatprep.subr.mxu0 0.0
        %531 = vmatpush1.msra.mxu0 0.0
        %532 = vmatprep.subr.mxu0 0.0
        %533 = vmatpush1.msra.mxu0 0.0
        %534 = vmatprep.subr.mxu0 0.0
        %535 = vmatpush1.msra.mxu0 0.0
        %536 = vmatprep.subr.mxu0 0.0
        %537 = vmatpush1.msra.mxu0 0.0
        %538 = vmatprep.subr.mxu0 0.0
        %539 = vmatpush1.msra.mxu0 0.0
        %540 = vmatprep.subr.mxu0 0.0
        %541 = vmatpush1.msra.mxu0 0.0
        %542 = vmatprep.subr.mxu0 0.0
        %543 = vmatpush1.msra.mxu0 0.0
        %544 = vmatprep.subr.mxu0 0.0
        %545 = vmatpush1.msra.mxu0 0.0
        %546 = vmatprep.subr.mxu0 0.0
        %547 = vmatpush1.msra.mxu0 0.0
        %548 = vmatprep.subr.mxu0 0.0
        %549 = vmatpush1.msra.mxu0 0.0
        %550 = vmatprep.subr.mxu0 0.0
        %551 = vmatpush1.msra.mxu0 0.0
        %552 = vmatprep.subr.mxu0 0.0
        %553 = vmatpush1.msra.mxu0 0.0
        %554 = vmatprep.subr.mxu0 0.0
        %555 = vmatpush1.msra.mxu0 0.0
        %556 = vmatprep.subr.mxu0 0.0
        %557 = vmatpush1.msra.mxu0 0.0
        %558 = vmatprep.subr.mxu0 0.0
        %559 = vmatpush1.msra.mxu0 0.0
        %560 = vmatprep.subr.mxu0 0.0
        %561 = vmatpush1.msra.mxu0 %v433
        %562 = vmatprep.subr.mxu0 0.0
        %563 = vmatpush2.msra.mxu0 0.0
        %564 = vmatprep.subr.mxu0 0.0
        %565 = vmatpush2.msra.mxu0 0.0
        %566 = vmatprep.subr.mxu0 0.0
        %567 = vmatpush2.msra.mxu0 0.0
        %568 = vmatprep.subr.mxu0 0.0
        %569 = vmatpush2.msra.mxu0 0.0
        %570 = vmatprep.subr.mxu0 0.0
        %571 = vmatpush2.msra.mxu0 0.0
        %572 = vmatprep.subr.mxu0 0.0
        %573 = vmatpush2.msra.mxu0 0.0
        %574 = vmatprep.subr.mxu0 0.0
        %575 = vmatpush2.msra.mxu0 0.0
        %576 = vmatprep.subr.mxu0 0.0
        %577 = vmatpush2.msra.mxu0 0.0
        %578 = vmatprep.subr.mxu0 0.0
        %579 = vmatpush2.msra.mxu0 0.0
        %580 = vmatprep.subr.mxu0 0.0
        %581 = vmatpush2.msra.mxu0 0.0
        %582 = vmatprep.subr.mxu0 0.0
        %583 = vmatpush2.msra.mxu0 0.0
        %584 = vmatprep.subr.mxu0 0.0
        %585 = vmatpush2.msra.mxu0 0.0
        %586 = vmatprep.subr.mxu0 0.0
        %587 = vmatpush2.msra.mxu0 0.0
        %588 = vmatprep.subr.mxu0 0.0
        %589 = vmatpush2.msra.mxu0 0.0
        %590 = vmatprep.subr.mxu0 0.0
        %591 = vmatpush2.msra.mxu0 0.0
        %592 = vmatprep.subr.mxu0 0.0
        %593 = vmatpush2.msra.mxu0 0.0
        %594 = vmatprep.mubr.f32.mxu0 0.0
        %595 = vmatmul.mubr.f32.gmra.mxu0 %v528
        %v596 = vpop.f32.mrf.mxu0
        %v597 = vadd.f32 0.0, %v596
        %v598 = vpop.f32.mrf.mxu0
        %599 = vdwg.mxu0
        %600 = vst.msk [vmem:[%s200] sm:$0xff] %vm436, %v597
        %p601 = scmp.lt.s32.totalorder %s22, 1
        %s602 = scalar_select %p601, %s22, 1
        %p603 = scmp.lt.s32.totalorder %s23, 7
        %s604 = scalar_select %p603, %s23, 7
        %s605 = smul.addr %s602, 8
        %s606 = sadd.s32 %s604, %s605
        %s607 = smul.addr %s606, 8
        %s608 = scalar_lea.vmem %s2, %s607
        %s609 = sand.u32 %s115, 1
        %s610 = scalar_lea.sflag [#allocation3], %s609
        %s611 = sand.u32 %s115, 1
        %s612 = smul.addr %s611, 8
        %s613 = scalar_lea.vmem [#allocation2], %s612
        // Predicated region
        $region29: #{attention_forward.2} parent=27 // pred_check
          %p614 = pneg %p97
        $region30: #{attention_forward.2} parent=27 // pred_check_branch
          %616 = sbr.rel (%p614) target = $region32
        $region31: #{attention_forward.2} parent=27 // pred_region
          _
        $region32: #{attention_forward.2} parent=27 // pred_fallthru
          _
        // Predicated region
        $region33: #{attention_forward.2} parent=27 // pred_check
          %p617 = pneg %p125
        $region34: #{attention_forward.2} parent=27 // pred_check_branch
          %619 = sbr.rel (%p617) target = $region36
        $region35: #{attention_forward.2} parent=27 // pred_region
          %s621 = ssub.s32 128, 128
          %622 = vsyncadd %s610, %s621
          %s623 = smul.addr %s22, 8
          %s624 = sadd.s32 %s23, %s623
          %s625 = smul.addr %s624, 128
          %s626 = scalar_lea.hbm %s3, %s625
          %s628 = sshll.u32 %s613, 4
          %s629 = int_to_ptr.vmem [resolvable:$true] %s628
          %631 = dma.vmem_to_hbm [thread:$0]  %s629, 128, %s626, %s610
        $region36: #{attention_forward.2} parent=27 // pred_fallthru
          _
      $region28: #{attention_forward.2} parent=5 // pred_fallthru
        _
      %p632 = scmp.le.s32.totalorder 2, %s13
      // Predicated region
      $region37: #{attention_forward.2} parent=5 // pred_check
        %p633 = pneg %p632
      $region38: #{attention_forward.2} parent=5 // pred_check_branch
        %635 = sbr.rel (%p633) target = $region40
      $region39: #{attention_forward.2} parent=5 // pred_region
        %s636 = ssub.s32 %s13, 2
        // Predicated region
        $region41: #{attention_forward.2} parent=39 // pred_check
          %p637 = pneg %p103
        $region42: #{attention_forward.2} parent=39 // pred_check_branch
          %639 = sbr.rel (%p637) target = $region44
        $region43: #{attention_forward.2} parent=39 // pred_region
          %p640 = scmp.lt.s32.totalorder %s24, 1
          %s641 = scalar_select %p640, %s24, 1
          %p642 = scmp.lt.s32.totalorder %s25, 7
          %s643 = scalar_select %p642, %s25, 7
          %s644 = smul.addr %s641, 8
          %s645 = sadd.s32 %s643, %s644
          %s646 = smul.addr %s645, 8
          %s647 = scalar_lea.vmem %s2, %s646
        $region44: #{attention_forward.2} parent=39 // pred_fallthru
          _
        // Predicated region
        $region45: #{attention_forward.2} parent=39 // pred_check
          %p648 = pneg %p131
        $region46: #{attention_forward.2} parent=39 // pred_check_branch
          %650 = sbr.rel (%p648) target = $region48
        $region47: #{attention_forward.2} parent=39 // pred_region
          %s651 = sand.u32 %s116, 1
          %s652 = scalar_lea.sflag [#allocation3], %s651
          %s653 = sand.u32 %s116, 1
          %s654 = smul.addr %s653, 8
          %s655 = scalar_lea.vmem [#allocation2], %s654
          %656 = dma.done %s652, 128
        $region48: #{attention_forward.2} parent=39 // pred_fallthru
          _
      $region40: #{attention_forward.2} parent=5 // pred_fallthru
        _
    $region6: #{attention_forward.2} parent=1 // loop_footer
      %s17 = sadd.s32 1, %s13
    $region7: #{attention_forward.2} parent=1 // loop_footer_branch
      %12 = sbr.rel target = $region3
    $region8: #{attention_forward.2} parent=1 // loop_exit
      _
    %657 = vsyncpa [#allocation3], 1
    %s658 = scalar_lea.sflag [#allocation3], 1
    %659 = vsyncpa %s658, 1

</llo_original>
